<compile_context>
chip_gen: v6e
topology: v6e:2x2x1
jax: 0.10.0
libtpu: 0.0.40
codegen_flags: <defaults>
</compile_context>

<pallas_src>
import functools
import math

import jax
import jax.numpy as jnp
from jax.experimental import pallas as pl
from jax.experimental.pallas import tpu as pltpu


# ----------------------------------------------------------------------------
# Generator MLP (tiny: (R, Dn) @ (Dn, Hd) @ (Hd, E)) -- plain JAX/XLA.
# ----------------------------------------------------------------------------
def _generator_mlp(omega, w1, b1, w2, b2):
    h = omega @ w1 + b1
    h = jnp.where(h > 0, h, 0.01 * h)          # LeakyReLU(0.01)
    return jnp.tanh(h @ w2 + b2)               # (R, E)


# ----------------------------------------------------------------------------
# Hot-path kernel:
#   x_ref     (tm, G*E)     grouped input rows (lane dense)
#   w_ref     (G*E, G*2R)   block-diag [omega_t | omega_t] (scale folded in)
#   phase_ref (1,  G*2R)    0 on cos lanes, pi/2 on sin lanes
#   o_ref     (tm, G*2R)    phi, lane dense, written with one unmasked store
# ----------------------------------------------------------------------------
def _rff_kernel(x_ref, w_ref, phase_ref, o_ref, *, out_scale):
    u = jnp.dot(x_ref[...], w_ref[...], preferred_element_type=jnp.float32)
    # cos(u - 0) = cos(u);  cos(u - pi/2) = sin(u): one transcendental pass,
    # one full-width store (no lane-offset half stores).
    o_ref[...] = (jnp.cos(u - phase_ref[...]) * out_scale).astype(o_ref.dtype)


# ----------------------------------------------------------------------------
# Tiling heuristics
# ----------------------------------------------------------------------------
def _pick_group(n_dims, total_rows):
    """Logical rows packed per kernel row so the output lane dim is a multiple
    of 128 (unmasked vld/vst, no VMEM padding for narrow feature dims)."""
    if n_dims % 128 == 0:
        return 1
    g = 128 // math.gcd(n_dims, 128)
    if 1 < g <= 8 and total_rows % g == 0:
        return g
    return 1                                    # fallback: narrow (but legal) blocks


def _pick_block_rows(mg, lane_in, lane_out, in_bytes, out_bytes,
                     vmem_budget_bytes=8 << 20, max_rows=2048, min_rows=512):
    """Largest tile that (a) keeps double-buffered in+out under ~8 MiB (fits
    even v5e's 16 MiB default scoped VMEM), (b) still yields ~4+ grid steps for
    DMA/compute overlap and v7x two-TensorCore sharding, (c) is a legal block
    (multiple of 8/16 rows or the full extent)."""
    per_row = 2 * (lane_in * in_bytes + lane_out * out_bytes)
    fit = max(64, vmem_budget_bytes // per_row)
    target = max(min_rows, pl.cdiv(mg, 4))
    bm = int(min(max_rows, fit, target))
    if bm >= mg:
        return mg
    return max(64, (bm // 64) * 64)


# ----------------------------------------------------------------------------
# pallas_call wrapper for the hot path
# ----------------------------------------------------------------------------
def _rff_pallas(x_g, w_big, phase_row, *, out_dtype, out_scale, block_rows=None):
    mg, lane_in = x_g.shape
    lane_out = w_big.shape[1]

    bm = block_rows or _pick_block_rows(
        mg, lane_in, lane_out,
        jnp.dtype(x_g.dtype).itemsize, jnp.dtype(out_dtype).itemsize)
    bm = min(bm, mg)
    grid = (pl.cdiv(mg, bm),)                   # partial last block masked by Pallas

    kernel = functools.partial(_rff_kernel, out_scale=out_scale)
    return pl.pallas_call(
        kernel,
        out_shape=jax.ShapeDtypeStruct((mg, lane_out), out_dtype),
        grid_spec=pltpu.PrefetchScalarGridSpec(
            num_scalar_prefetch=0,
            grid=grid,
            in_specs=[
                pl.BlockSpec((bm, lane_in), lambda i: (i, 0)),
                pl.BlockSpec((lane_in, lane_out), lambda i: (0, 0)),  # resident
                pl.BlockSpec((1, lane_out), lambda i: (0, 0)),        # resident
            ],
            out_specs=pl.BlockSpec((bm, lane_out), lambda i: (i, 0)),
        ),
        compiler_params=pltpu.CompilerParams(
            dimension_semantics=("parallel",)),   # shards steps across TCs on v7x
    )(x_g, w_big, phase_row)


# ----------------------------------------------------------------------------
# Module wrapper
# ----------------------------------------------------------------------------
def generative_rff_forward(x, omega, w1, b1, w2, b2, *, n_dims, softmax_temp,
                           out_dtype=None, block_rows=None):
    """x: (B, S, H, E)  -> phi: (B, S, H, n_dims)."""
    B, S, H, E = x.shape
    R = n_dims // 2
    out_dtype = out_dtype or x.dtype

    omega_gen = _generator_mlp(omega, w1, b1, w2, b2)            # (R, E)
    # Fold sqrt(softmax_temp) into the small matrix; duplicate columns so the
    # cos half and the sin half share one matmul / one cos() (phase trick).
    omega_t = (omega_gen * math.sqrt(softmax_temp)).T            # (E, R)
    w_dup = jnp.concatenate([omega_t, omega_t], axis=1)          # (E, 2R)

    M = B * S * H
    G = _pick_group(n_dims, M)
    if G > 1:
        w_big = jnp.kron(jnp.eye(G, dtype=w_dup.dtype), w_dup)   # (G*E, G*2R) block-diag
    else:
        w_big = w_dup

    phase_unit = jnp.concatenate([jnp.zeros((R,), jnp.float32),
                                  jnp.full((R,), math.pi / 2.0, jnp.float32)])
    phase_row = jnp.tile(phase_unit, G)[None, :]                  # (1, G*2R)

    x_g = x.reshape(M // G, G * E)                                # free, row-major
    phi_g = _rff_pallas(x_g, w_big, phase_row,
                        out_dtype=out_dtype,
                        out_scale=math.sqrt(2.0 / n_dims),
                        block_rows=block_rows)
    return phi_g.reshape(B, S, H, n_dims)                         # free, row-major


# ----------------------------------------------------------------------------
# Pure-JAX reference
# ----------------------------------------------------------------------------
def _reference(x, omega, w1, b1, w2, b2, *, n_dims, softmax_temp):
    og = _generator_mlp(omega, w1, b1, w2, b2)
    xs = x * math.sqrt(softmax_temp)
    u = jnp.matmul(xs, og.T, precision=jax.lax.Precision.HIGHEST)
    return jnp.concatenate([jnp.cos(u), jnp.sin(u)], -1) * math.sqrt(2.0 / n_dims)


if __name__ == "__main__":
    # Module hyperparameters (consistent with the PyTorch __init__)
    query_dims = 32            # E
    noise_dims = (8, 16)       # (noise_dim, generator hidden)
    n_dims = query_dims        # default: n_dims = query_dimensions
    softmax_temp = 1.0 / math.sqrt(query_dims)
    R = n_dims // 2

    key = jax.random.PRNGKey(0)
    k_x, k_x2, k_x3, k_om, k_w1, k_b1, k_w2, k_b2 = jax.random.split(key, 8)

    omega = jax.random.normal(k_om, (R, noise_dims[0]), dtype=jnp.float32)
    w1 = jax.random.normal(k_w1, (noise_dims[0], noise_dims[1]),
                           dtype=jnp.float32) / math.sqrt(noise_dims[0])
    b1 = jax.random.normal(k_b1, (noise_dims[1],), dtype=jnp.float32) * 0.01
    w2 = jax.random.normal(k_w2, (noise_dims[1], query_dims),
                           dtype=jnp.float32) / math.sqrt(noise_dims[1])
    b2 = jax.random.normal(k_b2, (query_dims,), dtype=jnp.float32) * 0.01

    fwd = functools.partial(generative_rff_forward, omega=omega, w1=w1, b1=b1,
                            w2=w2, b2=b2, n_dims=n_dims,
                            softmax_temp=softmax_temp)
    ref_fn = functools.partial(_reference, omega=omega, w1=w1, b1=b1, w2=w2,
                               b2=b2, n_dims=n_dims, softmax_temp=softmax_temp)

    # 1) Main config: lane-dense grouped path (G=4 -> 128-lane in/out blocks).
    x = jax.random.normal(k_x, (2, 8, 2, query_dims), dtype=jnp.float32)
    ref = ref_fn(x)
    phi = jax.block_until_ready(fwd(x))
    assert phi.shape == (2, 8, 2, n_dims)
    assert jnp.allclose(phi, ref, atol=5e-5, rtol=5e-5), \
        float(jnp.max(jnp.abs(phi - ref)))

    # 2) Multi-step grid with an uneven (Pallas-masked) last block.
    x2 = jax.random.normal(k_x2, (2, 9, 2, query_dims), dtype=jnp.float32)
    ref2 = ref_fn(x2)
    phi2 = jax.block_until_ready(fwd(x2, block_rows=8))
    assert jnp.allclose(phi2, ref2, atol=5e-5, rtol=5e-5), \
        float(jnp.max(jnp.abs(phi2 - ref2)))

    # 3) Fallback path: row count not divisible by the lane group -> G=1.
    x3 = jax.random.normal(k_x3, (1, 3, 1, query_dims), dtype=jnp.float32)
    ref3 = ref_fn(x3)
    phi3 = jax.block_until_ready(fwd(x3))
    assert jnp.allclose(phi3, ref3, atol=5e-5, rtol=5e-5), \
        float(jnp.max(jnp.abs(phi3 - ref3)))

    # 4) Optional bf16 output (halves HBM writeback on this mem-bound kernel).
    phi_bf16 = jax.block_until_ready(fwd(x, out_dtype=jnp.bfloat16))
    assert phi_bf16.dtype == jnp.bfloat16
    assert jnp.allclose(phi_bf16.astype(jnp.float32), ref, atol=8e-3), \
        float(jnp.max(jnp.abs(phi_bf16.astype(jnp.float32) - ref)))

    print("KERNEL_OK")
</pallas_src>

<mosaic_0001>
module attributes {stable_mosaic.version = 11 : i64} {
  func.func @_rff_kernel(%arg0: i32, %arg1: memref<8x128xf32, #tpu.memory_space<vmem>>, %arg2: memref<128x128xf32, #tpu.memory_space<vmem>>, %arg3: memref<1x128xf32, #tpu.memory_space<vmem>>, %arg4: memref<8x128xf32, #tpu.memory_space<vmem>>) attributes {dimension_semantics = [#tpu.dimension_semantics<parallel>], iteration_bounds = array<i64: 1>, scalar_prefetch = 0 : i64, scratch_operands = 0 : i64, tpu.core_type = #tpu.core_type<tc>, window_params = [{transform_indices = @transform_0, window_bounds = array<i64: 8, 128>}, {pipeline_mode = #tpu.pipeline_mode<synchronous>, transform_indices = @transform_1, window_bounds = array<i64: 128, 128>}, {pipeline_mode = #tpu.pipeline_mode<synchronous>, transform_indices = @transform_2, window_bounds = array<i64: 1, 128>}, {transform_indices = @transform_3, window_bounds = array<i64: 8, 128>}]} {
    %c0 = arith.constant 0 : index
    %c0_0 = arith.constant 0 : index
    %0 = vector.load %arg1[%c0, %c0_0] : memref<8x128xf32, #tpu.memory_space<vmem>>, vector<8x128xf32>
    %c0_1 = arith.constant 0 : index
    %c0_2 = arith.constant 0 : index
    %1 = vector.load %arg2[%c0_1, %c0_2] : memref<128x128xf32, #tpu.memory_space<vmem>>, vector<128x128xf32>
    %cst = arith.constant dense<0.000000e+00> : vector<8x128xf32>
    %2 = tpu.matmul %0, %1, %cst {dimension_numbers = #tpu.dot_dimension_numbers<[1], [0], [0], [1], [0, 0, 1, 1], [], []>} : vector<8x128xf32>, vector<128x128xf32>, vector<8x128xf32> -> vector<8x128xf32>
    %c0_3 = arith.constant 0 : index
    %c0_4 = arith.constant 0 : index
    %3 = vector.load %arg3[%c0_3, %c0_4] : memref<1x128xf32, #tpu.memory_space<vmem>>, vector<1x128xf32>
    %4 = vector.broadcast %3 : vector<1x128xf32> to vector<8x128xf32>
    %5 = arith.subf %2, %4 : vector<8x128xf32>
    %6 = math.cos %5 : vector<8x128xf32>
    %cst_5 = arith.constant 2.500000e-01 : f32
    %7 = vector.broadcast %cst_5 : f32 to vector<8x128xf32>
    %8 = arith.mulf %6, %7 : vector<8x128xf32>
    %c0_6 = arith.constant 0 : index
    %c0_7 = arith.constant 0 : index
    %9 = vector.load %arg4[%c0_6, %c0_7] : memref<8x128xf32, #tpu.memory_space<vmem>>, vector<8x128xf32>
    tpu.vector_store %arg4[%c0_6, %c0_7], %8 {strides = array<i32>} : memref<8x128xf32, #tpu.memory_space<vmem>>, vector<8x128xf32>,
    return
  }
  func.func @transform_0(%arg0: i32) -> (i32, i32) {
    %c0_i32 = arith.constant 0 : i32
    %c0_i32_0 = arith.constant 0 : i32
    return %arg0, %c0_i32 : i32, i32
  }
  func.func @transform_1(%arg0: i32) -> (i32, i32) {
    %c0_i32 = arith.constant 0 : i32
    %c0_i32_0 = arith.constant 0 : i32
    %c0_i32_1 = arith.constant 0 : i32
    return %c0_i32, %c0_i32_0 : i32, i32
  }
  func.func @transform_2(%arg0: i32) -> (i32, i32) {
    %c0_i32 = arith.constant 0 : i32
    %c0_i32_0 = arith.constant 0 : i32
    %c0_i32_1 = arith.constant 0 : i32
    return %c0_i32, %c0_i32_0 : i32, i32
  }
  func.func @transform_3(%arg0: i32) -> (i32, i32) {
    %c0_i32 = arith.constant 0 : i32
    %c0_i32_0 = arith.constant 0 : i32
    return %arg0, %c0_i32 : i32, i32
  }
}

</mosaic_0001>

<llo_original>
// kernel: tpu_custom_call.1
$region0: #{tpu_custom_call.1}
  #allocation0 [shape = 'u32[]', space=smem, size = 0x4, offset = 0x4, fixed_abs, tag = 'smem constant byte address 0x4 - core index']
  #allocation1 [shape = 'u32[144,128]{1,0:T(1,128)}', space=vmem, size = 0x12000, scoped, tag = 'internal scratch']
  %s0 = inlined_call_operand.hbm [shape: f32[8,128], index: 0, kind: input, shape index: {}]
  %s1 = inlined_call_operand.hbm [shape: f32[128,128], index: 1, kind: input, shape index: {}]
  %s2 = inlined_call_operand.vmem [shape: f32[1,128], index: 2, kind: input, shape index: {}]
  %s3 = inlined_call_operand.hbm [shape: f32[8,128], index: 3, kind: output, shape index: {}]
  %s4 = sld [smem:[#allocation0]]
  $region30: #{tpu_custom_call.1} parent=0
    _
  %s6 = ssub.s32 1, %s4
  %s7 = scalar_select 0, %s6, %s4
  $region1: #{tpu_custom_call.1} parent=0
    #allocation2 [shape = 'u8[4096]{0}', space=vmem, size = 0x1000, scoped, tag = 'input window, operand 0, single buffered']
    #allocation3 [shape = 's32[1]{0}', space=sflag, size = 0x4, scoped, tag = 'scoped memory for tpu_custom_call.1']
    #allocation4 [shape = 's32[1]{0}', space=sflag, size = 0x4, scoped, tag = 'scoped memory for tpu_custom_call.1']
    #allocation5 [shape = 'u8[65536]{0}', space=vmem, size = 0x10000, scoped, tag = 'input window, operand 1, single buffered']
    #allocation6 [shape = 's32[1]{0}', space=sflag, size = 0x4, scoped, tag = 'scoped memory for tpu_custom_call.1']
    #allocation7 [shape = 'u8[4096]{0}', space=vmem, size = 0x1000, scoped, tag = 'output window, operand 0, single buffered']
    %8 = vsyncpa [#allocation3], 0
    %9 = vsyncpa [#allocation6], 0
    %10 = vsyncpa [#allocation4], 0
    // Predicated region
    $region2: #{tpu_custom_call.1} parent=1 // pred_check
      _
    $region3: #{tpu_custom_call.1} parent=1 // pred_check_branch
      %12 = sbr.rel (0) target = $region5
    $region4: #{tpu_custom_call.1} parent=1 // pred_region
      %s14 = ssub.s32 128, 128
      %15 = vsyncadd [#allocation3], %s14
      %s17 = sshll.u32 [#allocation2], 4
      %s18 = int_to_ptr.vmem [resolvable:$true] %s17
      %20 = dma.hbm_to_vmem [thread:$0]  %s0, 128, %s18, [#allocation3]
    $region5: #{tpu_custom_call.1} parent=1 // pred_fallthru
      _
    // Predicated region
    $region6: #{tpu_custom_call.1} parent=1 // pred_check
      _
    $region7: #{tpu_custom_call.1} parent=1 // pred_check_branch
      %22 = sbr.rel (0) target = $region9
    $region8: #{tpu_custom_call.1} parent=1 // pred_region
      %s24 = ssub.s32 2048, 2048
      %25 = vsyncadd [#allocation6], %s24
      %s26 = sshll.u32 [#allocation5], 4
      %s27 = int_to_ptr.vmem [resolvable:$true] %s26
      %32 = dma.hbm_to_vmem [thread:$0]  %s1, 2048, %s27, [#allocation6], 128, 128, 8
    $region9: #{tpu_custom_call.1} parent=1 // pred_fallthru
      _
    // Predicated region
    $region10: #{tpu_custom_call.1} parent=1 // pred_check
      _
    $region11: #{tpu_custom_call.1} parent=1 // pred_check_branch
      %34 = sbr.rel (0) target = $region13
    $region12: #{tpu_custom_call.1} parent=1 // pred_region
      _
    $region13: #{tpu_custom_call.1} parent=1 // pred_fallthru
      _
    // Predicated region
    $region14: #{tpu_custom_call.1} parent=1 // pred_check
      _
    $region15: #{tpu_custom_call.1} parent=1 // pred_check_branch
      %36 = sbr.rel (0) target = $region17
    $region16: #{tpu_custom_call.1} parent=1 // pred_region
      %37 = dma.done [#allocation3], 128
    $region17: #{tpu_custom_call.1} parent=1 // pred_fallthru
      _
    // Predicated region
    $region18: #{tpu_custom_call.1} parent=1 // pred_check
      _
    $region19: #{tpu_custom_call.1} parent=1 // pred_check_branch
      %39 = sbr.rel (0) target = $region21
    $region20: #{tpu_custom_call.1} parent=1 // pred_region
      %40 = dma.done [#allocation6], 2048
    $region21: #{tpu_custom_call.1} parent=1 // pred_fallthru
      _
    %v41 = vld [vmem:[#allocation2] sm:$0xff]
    %v42 = vld [vmem:[#allocation5] sm:$0xff]
    %v43 = vld [vmem:[#allocation5 + $0x8] sm:$0xff]
    %v44 = vld [vmem:[#allocation5 + $0x10] sm:$0xff]
    %v45 = vld [vmem:[#allocation5 + $0x18] sm:$0xff]
    %v46 = vld [vmem:[#allocation5 + $0x20] sm:$0xff]
    %v47 = vld [vmem:[#allocation5 + $0x28] sm:$0xff]
    %v48 = vld [vmem:[#allocation5 + $0x30] sm:$0xff]
    %v49 = vld [vmem:[#allocation5 + $0x38] sm:$0xff]
    %v50 = vld [vmem:[#allocation5 + $0x40] sm:$0xff]
    %v51 = vld [vmem:[#allocation5 + $0x48] sm:$0xff]
    %v52 = vld [vmem:[#allocation5 + $0x50] sm:$0xff]
    %v53 = vld [vmem:[#allocation5 + $0x58] sm:$0xff]
    %v54 = vld [vmem:[#allocation5 + $0x60] sm:$0xff]
    %v55 = vld [vmem:[#allocation5 + $0x68] sm:$0xff]
    %v56 = vld [vmem:[#allocation5 + $0x70] sm:$0xff]
    %v57 = vld [vmem:[#allocation5 + $0x78] sm:$0xff]
    %58 = vmatprep.subr.mxu0 0.0
    %59 = vmatpush1.msra.mxu0 %v57
    %60 = vmatprep.subr.mxu0 0.0
    %61 = vmatpush1.msra.mxu0 %v56
    %62 = vmatprep.subr.mxu0 0.0
    %63 = vmatpush1.msra.mxu0 %v55
    %64 = vmatprep.subr.mxu0 0.0
    %65 = vmatpush1.msra.mxu0 %v54
    %66 = vmatprep.subr.mxu0 0.0
    %67 = vmatpush1.msra.mxu0 %v53
    %68 = vmatprep.subr.mxu0 0.0
    %69 = vmatpush1.msra.mxu0 %v52
    %70 = vmatprep.subr.mxu0 0.0
    %71 = vmatpush1.msra.mxu0 %v51
    %72 = vmatprep.subr.mxu0 0.0
    %73 = vmatpush1.msra.mxu0 %v50
    %74 = vmatprep.subr.mxu0 0.0
    %75 = vmatpush1.msra.mxu0 %v49
    %76 = vmatprep.subr.mxu0 0.0
    %77 = vmatpush1.msra.mxu0 %v48
    %78 = vmatprep.subr.mxu0 0.0
    %79 = vmatpush1.msra.mxu0 %v47
    %80 = vmatprep.subr.mxu0 0.0
    %81 = vmatpush1.msra.mxu0 %v46
    %82 = vmatprep.subr.mxu0 0.0
    %83 = vmatpush1.msra.mxu0 %v45
    %84 = vmatprep.subr.mxu0 0.0
    %85 = vmatpush1.msra.mxu0 %v44
    %86 = vmatprep.subr.mxu0 0.0
    %87 = vmatpush1.msra.mxu0 %v43
    %88 = vmatprep.subr.mxu0 0.0
    %89 = vmatpush1.msra.mxu0 %v42
    %90 = vmatprep.subr.mxu0 0.0
    %91 = vmatpush2.msra.mxu0 0.0
    %92 = vmatprep.subr.mxu0 0.0
    %93 = vmatpush2.msra.mxu0 0.0
    %94 = vmatprep.subr.mxu0 0.0
    %95 = vmatpush2.msra.mxu0 0.0
    %96 = vmatprep.subr.mxu0 0.0
    %97 = vmatpush2.msra.mxu0 0.0
    %98 = vmatprep.subr.mxu0 0.0
    %99 = vmatpush2.msra.mxu0 0.0
    %100 = vmatprep.subr.mxu0 0.0
    %101 = vmatpush2.msra.mxu0 0.0
    %102 = vmatprep.subr.mxu0 0.0
    %103 = vmatpush2.msra.mxu0 0.0
    %104 = vmatprep.subr.mxu0 0.0
    %105 = vmatpush2.msra.mxu0 0.0
    %106 = vmatprep.subr.mxu0 0.0
    %107 = vmatpush2.msra.mxu0 0.0
    %108 = vmatprep.subr.mxu0 0.0
    %109 = vmatpush2.msra.mxu0 0.0
    %110 = vmatprep.subr.mxu0 0.0
    %111 = vmatpush2.msra.mxu0 0.0
    %112 = vmatprep.subr.mxu0 0.0
    %113 = vmatpush2.msra.mxu0 0.0
    %114 = vmatprep.subr.mxu0 0.0
    %115 = vmatpush2.msra.mxu0 0.0
    %116 = vmatprep.subr.mxu0 0.0
    %117 = vmatpush2.msra.mxu0 0.0
    %118 = vmatprep.subr.mxu0 0.0
    %119 = vmatpush2.msra.mxu0 0.0
    %120 = vmatprep.subr.mxu0 0.0
    %121 = vmatpush2.msra.mxu0 0.0
    %122 = vmatprep.mubr.f32.mxu0 0.0
    %123 = vmatmul.mubr.f32.gmra.mxu0 %v41
    %v124 = vpop.f32.mrf.mxu0
    %v125 = vadd.f32 0.0, %v124
    %v126 = vpop.f32.mrf.mxu0
    %127 = vdwg.mxu0
    %v128 = vld [vmem:[%s2] sm:$0x1]
    %v130 = vlaneseq
    %v131 = vshrl.u32 %v130, 7
    %v132 = vsub.s32 0, %v131
    %v133 = vrot.slane %v128, %v132
    %v135 = vsub.f32 %v125, %v133
    %v136 = vand.u32 2147483647, %v135
    %vm137 = vcmp.le.f32.partialorder %v136, 0.7853982
    %vm138 = vcmp.lt.s32.totalorder %v135, 0
    %v139 = vand.u32 %v135, 2139095040
    %v140 = vshrl.u32 %v139, 23
    %v141 = vsub.s32 %v140, 127
    %v142 = vand.u32 2147483647, %v135
    %v143 = vand.u32 %v142, 8388607
    %v144 = vor.u32 %v143, 8388608
    %v145 = vsub.s32 0, %v144
    %v146 = vadd.s32 %v141, 1
    %vm147 = vcmp.gt.s32.totalorder %v146, 0
    %v148 = vsel %vm147, %v146, 0
    %v149 = vshrl.u32 %v148, 5
    %v150 = vand.u32 %v148, 31
    %v151 = vsub.s32 32, %v150
    %v152 = vshrl.u32 683565275, %v151
    %v153 = vshll.u32 683565275, %v150
    %v154 = vshrl.u32 2475754826, %v151
    %v155 = vor.u32 %v153, %v154
    %v156 = vshll.u32 2475754826, %v150
    %v157 = vshrl.u32 2131351028, %v151
    %v158 = vor.u32 %v156, %v157
    %v159 = vshll.u32 2131351028, %v150
    %v160 = vshrl.u32 2102212464, %v151
    %v161 = vor.u32 %v159, %v160
    %v162 = vshll.u32 2102212464, %v150
    %v163 = vshrl.u32 920167782, %v151
    %v164 = vor.u32 %v162, %v163
    %v165 = vshll.u32 920167782, %v150
    %v166 = vshrl.u32 1326507024, %v151
    %v167 = vor.u32 %v165, %v166
    %vm168 = vcmp.lt.s32.totalorder %v149, 1
    %vm169 = vcmp.lt.s32.totalorder %v149, 2
    %vm170 = vcmp.lt.s32.totalorder %v149, 3
    %vm171 = vcmp.lt.s32.totalorder %v149, 4
    %v172 = vsel %vm168, %v152, %v155
    %v173 = vsel %vm171, %v161, 2102212464
    %v174 = vsel %vm170, %v158, %v173
    %v175 = vsel %vm169, %v172, %v174
    %v176 = vsel %vm168, %v155, %v158
    %v177 = vsel %vm171, %v164, 920167782
    %v178 = vsel %vm170, %v161, %v177
    %v179 = vsel %vm169, %v176, %v178
    %v180 = vsel %vm168, %v158, %v161
    %v181 = vsel %vm171, %v167, 1326507024
    %v182 = vsel %vm170, %v164, %v181
    %v183 = vsel %vm169, %v180, %v182
    %v184 = vshll.u32 %v144, 8
    %v185 = vmul.u32.u64.compose %v184, %v183
    %v186 = vextract.low.u32 %v185
    %v187 = vextract.high.u32 %v185
    %v188 = vmul.u32.u64.compose %v184, %v179
    %v189 = vextract.low.u32 %v188
    %v190 = vextract.high.u32 %v188
    %v191 = vmul.u32 %v184, %v175
    %v192 = vadd.s32 %v187, %v189
    %vm193 = vc.u32 %v187, %v189
    %v194 = vadd.s32 %v190, 1
    %v195 = vsel %vm193, %v194, %v190
    %v196 = vadd.s32 %v191, %v195
    %v197 = vadd.s32 %v196, 536870912
    %v198 = vshrl.u32 %v197, 30
    %v199 = vshll.u32 %v198, 30
    %v200 = vsub.s32 %v196, %v199
    %vm201 = vcmp.lt.s32.totalorder %v200, 0
    %v202 = vsub.s32 0, %v200
    %v203 = vsel %vm201, %v202, %v200
    %v204 = vclz %v203
    %v205 = vsub.s32 %v204, 2
    %vm206 = vcmp.gt.s32.totalorder 0, %v205
    %v207 = vsel %vm206, 0, %v205
    %v208 = vsub.s32 32, %v207
    %v209 = vshll.u32 %v200, %v207
    %v210 = vshrl.u32 %v192, %v208
    %v211 = vor.u32 %v209, %v210
    %v212 = vsub.s32 4294967266, %v207
    %v213 = vadd.s32 %v212, 127
    %v214 = vshll.u32 %v213, 23
    %v215 = vor.u32 4788187, %v214
    %v216 = vand.u32 2147483647, %v215
    %v218 = vcvt.s32.f32 %v211
    %v219 = vmul.f32 %v218, %v216
    %v220 = vxor.u32 %v219, 2147483648
    %v221 = vsel %vm138, %v220, %v219
    %v222 = vsub.s32 4, %v198
    %v223 = vsel %vm138, %v222, %v198
    %v224 = vsel %vm137, %v135, %v221
    %v225 = vsel %vm137, 0, %v223
    %v226 = vcosq.f32.pop %v224
    %v227 = vsinq.f32.pop %v224
    %vm228 = vweird.f32 %v135
    %v229 = vand.u32 %v225, 3
    %vm230 = vcmp.lt.s32.totalorder %v229, 2
    %vm231 = vcmp.eq.s32.totalorder %v229, 0
    %v232 = vxor.u32 %v227, 2147483648
    %v233 = vsel %vm231, %v226, %v232
    %vm234 = vcmp.eq.s32.totalorder %v229, 2
    %v235 = vxor.u32 %v226, 2147483648
    %v236 = vsel %vm234, %v235, %v227
    %v237 = vsel %vm230, %v233, %v236
    %v238 = vsel %vm228, nan, %v237
    %v239 = vmul.f32 %v238, 0.25
    %240 = vst [vmem:[#allocation7] sm:$0xff] %v239
    // Predicated region
    $region22: #{tpu_custom_call.1} parent=1 // pred_check
      _
    $region23: #{tpu_custom_call.1} parent=1 // pred_check_branch
      %242 = sbr.rel (0) target = $region25
    $region24: #{tpu_custom_call.1} parent=1 // pred_region
      %s244 = ssub.s32 128, 128
      %245 = vsyncadd [#allocation4], %s244
      %s247 = sshll.u32 [#allocation7], 4
      %s248 = int_to_ptr.vmem [resolvable:$true] %s247
      %250 = dma.vmem_to_hbm [thread:$0]  %s248, 128, %s3, [#allocation4]
    $region25: #{tpu_custom_call.1} parent=1 // pred_fallthru
      _
    // Predicated region
    $region26: #{tpu_custom_call.1} parent=1 // pred_check
      _
    $region27: #{tpu_custom_call.1} parent=1 // pred_check_branch
      %252 = sbr.rel (0) target = $region29
    $region28: #{tpu_custom_call.1} parent=1 // pred_region
      %253 = dma.done [#allocation4], 128
    $region29: #{tpu_custom_call.1} parent=1 // pred_fallthru
      _
    %254 = vsyncpa [#allocation3], 1
    %255 = vsyncpa [#allocation6], 1
    %256 = vsyncpa [#allocation4], 1

</llo_original>
